<compile_context>
chip_gen: v7x
topology: tpu7x:2x2x1
jax: 0.10.0
libtpu: 0.0.40
codegen_flags: <defaults>
</compile_context>

<pallas_src>
import functools

import jax
import jax.numpy as jnp
from jax.experimental import pallas as pl
from jax.experimental.pallas import tpu as pltpu

LANE = 128


def _round_up(n, m):
    return ((n + m - 1) // m) * m


def dueling_q_kernel(x_ref, w1_ref, w2_ref, wh_ref, b_ref, out_ref, acc_ref, *,
                     action_size, batch_real):
    """One batch tile per grid step; output slab + adv-sum stay resident."""
    i = pl.program_id(0)
    tb = x_ref.shape[0]
    w = out_ref.shape[1]

    @pl.when(i == 0)
    def _init():
        acc_ref[...] = jnp.zeros_like(acc_ref)

    # fc1 + relu  (bf16 MXU operands, f32 accumulate / bias / relu)
    h1 = jnp.dot(x_ref[...], w1_ref[...], preferred_element_type=jnp.float32)
    h1 = jnp.maximum(h1 + b_ref[0:1, :], 0.0)

    # fc2 + relu
    h2 = jnp.dot(h1.astype(w2_ref.dtype), w2_ref[...],
                 preferred_element_type=jnp.float32)
    h2 = jnp.maximum(h2 + b_ref[1:2, :], 0.0)

    # fused heads: cols [0, A) = advantage, col A = value, cols > A = 0-weights
    head = jnp.dot(h2.astype(wh_ref.dtype), wh_ref[...],
                   preferred_element_type=jnp.float32)
    head = head + b_ref[2:3, :]

    val = head[:, action_size:action_size + 1]                 # (tb, 1)

    # Lane-dense (tb, W) store; columns >= A are junk and sliced off outside.
    start = pl.multiple_of(i * tb, tb)
    out_ref[pl.ds(start, tb), :] = (head + val).astype(out_ref.dtype)

    # Accumulate the sum of the *real* advantage entries (mask pad rows/lanes).
    row = jax.lax.broadcasted_iota(jnp.int32, (tb, w), 0) + i * tb
    col = jax.lax.broadcasted_iota(jnp.int32, (tb, w), 1)
    keep = (row < batch_real) & (col < action_size)
    acc_ref[...] += jnp.sum(jnp.where(keep, head, 0.0), keepdims=True)

    # Type-1 dueling: subtract the GLOBAL advantage mean (batch x actions) once
    # every tile has been seen, while the output slab is still in VMEM.
    @pl.when(i == pl.num_programs(0) - 1)
    def _finalize():
        mean = acc_ref[...] * (1.0 / float(batch_real * action_size))
        out_ref[...] = out_ref[...] - mean


def prepare_operands(params, *, param_dtype=jnp.bfloat16):
    """Pad to MXU-friendly shapes, fuse the value head into the advantage
    matmul (column A), and fold the three biases into one (3, W) slab."""
    w1, b1 = params["w1"], params["b1"]
    w2, b2 = params["w2"], params["b2"]
    wa, ba = params["wa"], params["ba"]
    wv, bv = params["wv"], params["bv"]

    state_size, f1 = w1.shape
    f2 = w2.shape[1]
    a = wa.shape[1]

    w = _round_up(max(f1, f2, a + 1), LANE)      # common padded feature width
    s_pad = _round_up(state_size, LANE)          # MXU-friendly K for fc1

    def pad2(m, rows, cols):
        return jnp.pad(m, ((0, rows - m.shape[0]), (0, cols - m.shape[1])))

    w1p = pad2(w1, s_pad, w)
    w2p = pad2(w2, w, w)
    whp = (jnp.zeros((w, w), w1.dtype)
           .at[:f2, :a].set(wa)
           .at[:f2, a].set(wv[:, 0]))

    bias = (jnp.zeros((3, w), jnp.float32)
            .at[0, :f1].set(b1.reshape(-1))
            .at[1, :f2].set(b2.reshape(-1))
            .at[2, :a].set(ba.reshape(-1))
            .at[2, a].set(bv.reshape(-1)[0]))

    dims = {"s_pad": s_pad, "w": w, "a": a}
    return (w1p.astype(param_dtype), w2p.astype(param_dtype),
            whp.astype(param_dtype), bias, dims)


def dueling_q_forward(x, params, *, tile_b=None, param_dtype=jnp.bfloat16):
    """x: (B, state_size) float32. Returns (B, action_size) float32 Q-values."""
    b, s = x.shape
    w1p, w2p, whp, bias, dims = prepare_operands(params, param_dtype=param_dtype)
    s_pad, w, a = dims["s_pad"], dims["w"], dims["a"]

    if tile_b is None:
        # >=256-row tiles amortize the ~0.35us/step overhead; 512 keeps the
        # double-buffered x tile comfortably inside v7x's 64 MiB VMEM (can be
        # raised toward 4096-8192 on v5e/v6e's 128 MiB for very large batches).
        tile_b = 512 if b >= 512 else _round_up(b, 8)
    tile_b = max(8, _round_up(tile_b, 8))
    b_pad = _round_up(b, tile_b)
    n_tiles = b_pad // tile_b

    x_pad = jnp.zeros((b_pad, s_pad), param_dtype).at[:b, :s].set(
        x.astype(param_dtype))

    kernel = functools.partial(dueling_q_kernel, action_size=a, batch_real=b)

    itemsize = jnp.dtype(param_dtype).itemsize
    flops = 2 * b_pad * (s_pad * w + w * w + w * w)
    bytes_accessed = ((x_pad.size + w1p.size + w2p.size + whp.size) * itemsize
                      + bias.size * 4 + b_pad * w * 4)

    out = pl.pallas_call(
        kernel,
        out_shape=jax.ShapeDtypeStruct((b_pad, w), jnp.float32),
        grid=(n_tiles,),
        in_specs=[
            pl.BlockSpec((tile_b, s_pad), lambda i: (i, 0)),   # x: streamed
            pl.BlockSpec((s_pad, w), lambda i: (0, 0)),        # weights resident,
            pl.BlockSpec((w, w), lambda i: (0, 0)),            #   DMA'd once
            pl.BlockSpec((w, w), lambda i: (0, 0)),
            pl.BlockSpec((3, w), lambda i: (0, 0)),            # fused bias slab
        ],
        # Output slab stays resident in VMEM across the grid (constant index
        # map) so the global advantage-mean can be applied on the last step.
        out_specs=pl.BlockSpec((b_pad, w), lambda i: (0, 0)),
        scratch_shapes=[pltpu.VMEM((1, 1), jnp.float32)],      # adv-sum acc
        compiler_params=pltpu.CompilerParams(
            # Must stay "arbitrary": the advantage mean is a global reduction
            # across batch tiles (cross-step accumulator + resident output).
            # If the mean were per-row or applied outside the kernel, this axis
            # could be "parallel" to shard across v7x's two TensorCores.
            dimension_semantics=("arbitrary",),
        ),
        cost_estimate=pl.CostEstimate(flops=flops, transcendentals=0,
                                      bytes_accessed=bytes_accessed),
    )(x_pad, w1p, w2p, whp, bias)

    # NOTE: for extremely large B the resident (b_pad, 128) f32 slab should be
    # replaced by a two-phase grid (adv-sum pass, then write pass).
    return out[:b, :a]


def init_params(key, state_size, action_size, fc1_units=128, fc2_units=64):
    """nn.Linear-style U(-1/sqrt(fan_in), 1/sqrt(fan_in)) init; weights stored
    pre-transposed as (in_features, out_features)."""
    def linear(k, fan_in, fan_out):
        kw, kb = jax.random.split(k)
        lim = 1.0 / jnp.sqrt(jnp.float32(fan_in))
        wt = jax.random.uniform(kw, (fan_in, fan_out), jnp.float32, -lim, lim)
        bs = jax.random.uniform(kb, (1, fan_out), jnp.float32, -lim, lim)
        return wt, bs

    k1, k2, k3, k4 = jax.random.split(key, 4)
    w1, b1 = linear(k1, state_size, fc1_units)
    w2, b2 = linear(k2, fc1_units, fc2_units)
    wa, ba = linear(k3, fc2_units, action_size)
    wv, bv = linear(k4, fc2_units, 1)
    return {"w1": w1, "b1": b1, "w2": w2, "b2": b2,
            "wa": wa, "ba": ba, "wv": wv, "bv": bv}


def reference_forward(x, p, compute_dtype=jnp.float32):
    """Plain-JAX reference. compute_dtype=bfloat16 mirrors the kernel's
    bf16-operand / f32-accumulate policy; float32 mirrors PyTorch math."""
    c = lambda t: t.astype(compute_dtype)
    f32 = jnp.float32
    h1 = jnp.maximum(
        jnp.dot(c(x), c(p["w1"]), preferred_element_type=f32) + p["b1"], 0.0)
    h2 = jnp.maximum(
        jnp.dot(c(h1), c(p["w2"]), preferred_element_type=f32) + p["b2"], 0.0)
    adv = jnp.dot(c(h2), c(p["wa"]), preferred_element_type=f32) + p["ba"]
    val = jnp.dot(c(h2), c(p["wv"]), preferred_element_type=f32) + p["bv"]
    return val + adv - jnp.mean(adv)   # PyTorch .mean(): over ALL elements


if __name__ == "__main__":
    key = jax.random.PRNGKey(0)
    k_x, k_p = jax.random.split(key)

    batch = 8
    state_size = 16
    action_size = 4

    x = jax.random.normal(k_x, (batch, state_size), dtype=jnp.float32)
    params = init_params(k_p, state_size, action_size)

    q = jax.block_until_ready(dueling_q_forward(x, params))
    assert q.shape == (batch, action_size)

    # Strict check vs. a reference that mirrors the kernel's dtype policy
    # (bf16 MXU operands, f32 accumulation).
    q_bf16_ref = reference_forward(x, params, compute_dtype=jnp.bfloat16)
    assert jnp.allclose(q, q_bf16_ref, atol=1e-3, rtol=1e-3), "mismatch vs bf16 ref"

    # Looser sanity check vs. full-f32 (PyTorch-equivalent) math.
    q_f32_ref = reference_forward(x, params, compute_dtype=jnp.float32)
    assert jnp.allclose(q, q_f32_ref, atol=5e-2, rtol=5e-2), "mismatch vs f32 ref"

    print("KERNEL_OK")
</pallas_src>

<mosaic_0001>
module attributes {stable_mosaic.version = 11 : i64} {
  func.func @dueling_q_kernel(%arg0: i32, %arg1: memref<8x128xbf16, #tpu.memory_space<vmem>>, %arg2: memref<128x128xbf16, #tpu.memory_space<vmem>>, %arg3: memref<128x128xbf16, #tpu.memory_space<vmem>>, %arg4: memref<128x128xbf16, #tpu.memory_space<vmem>>, %arg5: memref<3x128xf32, #tpu.memory_space<vmem>>, %arg6: memref<8x128xf32, #tpu.memory_space<vmem>>, %arg7: memref<1x1xf32, #tpu.memory_space<vmem>>) attributes {dimension_semantics = [#tpu.dimension_semantics<arbitrary>], iteration_bounds = array<i64: 1>, scalar_prefetch = 0 : i64, scratch_operands = 1 : i64, tpu.core_type = #tpu.core_type<tc>, window_params = [{transform_indices = @transform_0, window_bounds = array<i64: 8, 128>}, {pipeline_mode = #tpu.pipeline_mode<synchronous>, transform_indices = @transform_1, window_bounds = array<i64: 128, 128>}, {pipeline_mode = #tpu.pipeline_mode<synchronous>, transform_indices = @transform_2, window_bounds = array<i64: 128, 128>}, {pipeline_mode = #tpu.pipeline_mode<synchronous>, transform_indices = @transform_3, window_bounds = array<i64: 128, 128>}, {pipeline_mode = #tpu.pipeline_mode<synchronous>, transform_indices = @transform_4, window_bounds = array<i64: 3, 128>}, {pipeline_mode = #tpu.pipeline_mode<synchronous>, transform_indices = @transform_5, window_bounds = array<i64: 8, 128>}]} {
    %c0_i32 = arith.constant 0 : i32
    %0 = arith.cmpi eq, %arg0, %c0_i32 : i32
    %1 = arith.extui %0 : i1 to i32
    %c0_i32_0 = arith.constant 0 : i32
    %2 = arith.cmpi ne, %1, %c0_i32_0 : i32
    scf.if %2 {
      %cst_27 = arith.constant 0.000000e+00 : f32
      %55 = vector.broadcast %cst_27 : f32 to vector<1x1xf32>
      %c0_28 = arith.constant 0 : index
      %c0_29 = arith.constant 0 : index
      %56 = vector.load %arg7[%c0_28, %c0_29] : memref<1x1xf32, #tpu.memory_space<vmem>>, vector<1x1xf32>
      tpu.vector_store %arg7[%c0_28, %c0_29], %55 {strides = array<i32>} : memref<1x1xf32, #tpu.memory_space<vmem>>, vector<1x1xf32>,
    } else {
    }
    %c0 = arith.constant 0 : index
    %c0_1 = arith.constant 0 : index
    %3 = vector.load %arg1[%c0, %c0_1] : memref<8x128xbf16, #tpu.memory_space<vmem>>, vector<8x128xbf16>
    %c0_2 = arith.constant 0 : index
    %c0_3 = arith.constant 0 : index
    %4 = vector.load %arg2[%c0_2, %c0_3] : memref<128x128xbf16, #tpu.memory_space<vmem>>, vector<128x128xbf16>
    %cst = arith.constant dense<0.000000e+00> : vector<8x128xf32>
    %5 = tpu.matmul %3, %4, %cst {dimension_numbers = #tpu.dot_dimension_numbers<[1], [0], [0], [1], [0, 0, 1, 1], [], []>} : vector<8x128xbf16>, vector<128x128xbf16>, vector<8x128xf32> -> vector<8x128xf32>
    %c0_4 = arith.constant 0 : index
    %c0_5 = arith.constant 0 : index
    %6 = vector.load %arg5[%c0_4, %c0_5] : memref<3x128xf32, #tpu.memory_space<vmem>>, vector<1x128xf32>
    %7 = vector.broadcast %6 : vector<1x128xf32> to vector<8x128xf32>
    %8 = arith.addf %5, %7 : vector<8x128xf32>
    %cst_6 = arith.constant 0.000000e+00 : f32
    %9 = vector.broadcast %cst_6 : f32 to vector<8x128xf32>
    %10 = arith.maximumf %8, %9 : vector<8x128xf32>
    %11 = arith.truncf %10 : vector<8x128xf32> to vector<8x128xbf16>
    %c0_7 = arith.constant 0 : index
    %c0_8 = arith.constant 0 : index
    %12 = vector.load %arg3[%c0_7, %c0_8] : memref<128x128xbf16, #tpu.memory_space<vmem>>, vector<128x128xbf16>
    %cst_9 = arith.constant dense<0.000000e+00> : vector<8x128xf32>
    %13 = tpu.matmul %11, %12, %cst_9 {dimension_numbers = #tpu.dot_dimension_numbers<[1], [0], [0], [1], [0, 0, 1, 1], [], []>} : vector<8x128xbf16>, vector<128x128xbf16>, vector<8x128xf32> -> vector<8x128xf32>
    %c1 = arith.constant 1 : index
    %c0_10 = arith.constant 0 : index
    %14 = vector.load %arg5[%c1, %c0_10] : memref<3x128xf32, #tpu.memory_space<vmem>>, vector<1x128xf32>
    %15 = vector.broadcast %14 : vector<1x128xf32> to vector<8x128xf32>
    %16 = arith.addf %13, %15 : vector<8x128xf32>
    %cst_11 = arith.constant 0.000000e+00 : f32
    %17 = vector.broadcast %cst_11 : f32 to vector<8x128xf32>
    %18 = arith.maximumf %16, %17 : vector<8x128xf32>
    %19 = arith.truncf %18 : vector<8x128xf32> to vector<8x128xbf16>
    %c0_12 = arith.constant 0 : index
    %c0_13 = arith.constant 0 : index
    %20 = vector.load %arg4[%c0_12, %c0_13] : memref<128x128xbf16, #tpu.memory_space<vmem>>, vector<128x128xbf16>
    %cst_14 = arith.constant dense<0.000000e+00> : vector<8x128xf32>
    %21 = tpu.matmul %19, %20, %cst_14 {dimension_numbers = #tpu.dot_dimension_numbers<[1], [0], [0], [1], [0, 0, 1, 1], [], []>} : vector<8x128xbf16>, vector<128x128xbf16>, vector<8x128xf32> -> vector<8x128xf32>
    %c2 = arith.constant 2 : index
    %c0_15 = arith.constant 0 : index
    %22 = vector.load %arg5[%c2, %c0_15] : memref<3x128xf32, #tpu.memory_space<vmem>>, vector<1x128xf32>
    %23 = vector.broadcast %22 : vector<1x128xf32> to vector<8x128xf32>
    %24 = arith.addf %21, %23 : vector<8x128xf32>
    %25 = vector.extract_strided_slice %24 {offsets = [0, 4], sizes = [8, 1], strides = [1, 1]} : vector<8x128xf32> to vector<8x1xf32>
    %c8_i32 = arith.constant 8 : i32
    %26 = arith.muli %arg0, %c8_i32 : i32
    %27 = tpu.assume_multiple %26, 8 : i32
    %28 = vector.broadcast %25 : vector<8x1xf32> to vector<8x128xf32>
    %29 = arith.addf %24, %28 : vector<8x128xf32>
    %30 = arith.index_cast %27 : i32 to index
    %c0_16 = arith.constant 0 : index
    %31 = vector.load %arg6[%30, %c0_16] : memref<8x128xf32, #tpu.memory_space<vmem>>, vector<8x128xf32>
    tpu.vector_store %arg6[%30, %c0_16], %29 {strides = array<i32>} : memref<8x128xf32, #tpu.memory_space<vmem>>, vector<8x128xf32>,
    %32 = tpu.iota {dimensions = array<i32: 0>} : vector<8x128xi32>
    %c8_i32_17 = arith.constant 8 : i32
    %33 = arith.muli %arg0, %c8_i32_17 : i32
    %34 = vector.broadcast %33 : i32 to vector<8x128xi32>
    %35 = arith.addi %32, %34 : vector<8x128xi32>
    %36 = tpu.iota {dimensions = array<i32: 1>} : vector<8x128xi32>
    %c8_i32_18 = arith.constant 8 : i32
    %37 = vector.broadcast %c8_i32_18 : i32 to vector<8x128xi32>
    %38 = arith.cmpi slt, %35, %37 : vector<8x128xi32>
    %c4_i32 = arith.constant 4 : i32
    %39 = vector.broadcast %c4_i32 : i32 to vector<8x128xi32>
    %40 = arith.cmpi slt, %36, %39 : vector<8x128xi32>
    %41 = arith.andi %38, %40 : vector<8x128xi1>
    %c0_19 = arith.constant 0 : index
    %c0_20 = arith.constant 0 : index
    %42 = vector.load %arg7[%c0_19, %c0_20] : memref<1x1xf32, #tpu.memory_space<vmem>>, vector<1x1xf32>
    %cst_21 = arith.constant 0.000000e+00 : f32
    %43 = vector.broadcast %cst_21 : f32 to vector<8x128xf32>
    %44 = arith.select %41, %24, %43 : vector<8x128xi1>, vector<8x128xf32>
    %45 = vector.shape_cast %44 : vector<8x128xf32> to vector<1x8x128xf32>
    %cst_22 = arith.constant dense<0.000000e+00> : vector<1xf32>
    %46 = vector.multi_reduction <add>, %45, %cst_22 [1, 2] : vector<1x8x128xf32> to vector<1xf32>
    %47 = vector.shape_cast %46 : vector<1xf32> to vector<1x1x1xf32>
    %48 = vector.extract %47[0, 0, 0] : f32 from vector<1x1x1xf32>
    %49 = vector.broadcast %48 : f32 to vector<1x1xf32>
    %50 = arith.addf %42, %49 : vector<1x1xf32>
    %c0_23 = arith.constant 0 : index
    %c0_24 = arith.constant 0 : index
    %51 = vector.load %arg7[%c0_23, %c0_24] : memref<1x1xf32, #tpu.memory_space<vmem>>, vector<1x1xf32>
    tpu.vector_store %arg7[%c0_23, %c0_24], %50 {strides = array<i32>} : memref<1x1xf32, #tpu.memory_space<vmem>>, vector<1x1xf32>,
    %c0_i32_25 = arith.constant 0 : i32
    %52 = arith.cmpi eq, %arg0, %c0_i32_25 : i32
    %53 = arith.extui %52 : i1 to i32
    %c0_i32_26 = arith.constant 0 : i32
    %54 = arith.cmpi ne, %53, %c0_i32_26 : i32
    scf.if %54 {
      %c0_27 = arith.constant 0 : index
      %c0_28 = arith.constant 0 : index
      %55 = vector.load %arg7[%c0_27, %c0_28] : memref<1x1xf32, #tpu.memory_space<vmem>>, vector<1x1xf32>
      %cst_29 = arith.constant 3.125000e-02 : f32
      %56 = vector.broadcast %cst_29 : f32 to vector<1x1xf32>
      %57 = arith.mulf %55, %56 : vector<1x1xf32>
      %c0_30 = arith.constant 0 : index
      %c0_31 = arith.constant 0 : index
      %58 = vector.load %arg6[%c0_30, %c0_31] : memref<8x128xf32, #tpu.memory_space<vmem>>, vector<8x128xf32>
      %59 = vector.broadcast %57 : vector<1x1xf32> to vector<8x128xf32>
      %60 = arith.subf %58, %59 : vector<8x128xf32>
      %c0_32 = arith.constant 0 : index
      %c0_33 = arith.constant 0 : index
      %61 = vector.load %arg6[%c0_32, %c0_33] : memref<8x128xf32, #tpu.memory_space<vmem>>, vector<8x128xf32>
      tpu.vector_store %arg6[%c0_32, %c0_33], %60 {strides = array<i32>} : memref<8x128xf32, #tpu.memory_space<vmem>>, vector<8x128xf32>,
    } else {
    }
    return
  }
  func.func @transform_0(%arg0: i32) -> (i32, i32) {
    %c0_i32 = arith.constant 0 : i32
    %c0_i32_0 = arith.constant 0 : i32
    return %arg0, %c0_i32 : i32, i32
  }
  func.func @transform_1(%arg0: i32) -> (i32, i32) {
    %c0_i32 = arith.constant 0 : i32
    %c0_i32_0 = arith.constant 0 : i32
    %c0_i32_1 = arith.constant 0 : i32
    return %c0_i32, %c0_i32_0 : i32, i32
  }
  func.func @transform_2(%arg0: i32) -> (i32, i32) {
    %c0_i32 = arith.constant 0 : i32
    %c0_i32_0 = arith.constant 0 : i32
    %c0_i32_1 = arith.constant 0 : i32
    return %c0_i32, %c0_i32_0 : i32, i32
  }
  func.func @transform_3(%arg0: i32) -> (i32, i32) {
    %c0_i32 = arith.constant 0 : i32
    %c0_i32_0 = arith.constant 0 : i32
    %c0_i32_1 = arith.constant 0 : i32
    return %c0_i32, %c0_i32_0 : i32, i32
  }
  func.func @transform_4(%arg0: i32) -> (i32, i32) {
    %c0_i32 = arith.constant 0 : i32
    %c0_i32_0 = arith.constant 0 : i32
    %c0_i32_1 = arith.constant 0 : i32
    return %c0_i32, %c0_i32_0 : i32, i32
  }
  func.func @transform_5(%arg0: i32) -> (i32, i32) {
    %c0_i32 = arith.constant 0 : i32
    %c0_i32_0 = arith.constant 0 : i32
    %c0_i32_1 = arith.constant 0 : i32
    return %c0_i32, %c0_i32_0 : i32, i32
  }
}

</mosaic_0001>

<llo_original>
// kernel: tpu_custom_call.1
$region0: #{tpu_custom_call.1}
  #allocation0 [shape = 'u32[]', space=smem, size = 0x4, offset = 0x4, fixed_abs, tag = 'smem constant byte address 0x4 - core index']
  #allocation1 [shape = 'u32[144,128]{1,0:T(1,128)}', space=vmem, size = 0x12000, scoped, tag = 'internal scratch']
  #allocation2 [shape = 'f32[1,1]{1,0:T(1,128)}', space=vmem, size = 0x200, scoped, tag = 'scratch operand']
  %s0 = inlined_call_operand.hbm [shape: bf16[8,128], index: 0, kind: input, shape index: {}]
  %s1 = inlined_call_operand.hbm [shape: bf16[128,128], index: 1, kind: input, shape index: {}]
  %s2 = inlined_call_operand.hbm [shape: bf16[128,128], index: 2, kind: input, shape index: {}]
  %s3 = inlined_call_operand.hbm [shape: bf16[128,128], index: 3, kind: input, shape index: {}]
  %s4 = inlined_call_operand.vmem [shape: f32[3,128], index: 4, kind: input, shape index: {}]
  %s5 = inlined_call_operand.hbm [shape: f32[8,128], index: 5, kind: output, shape index: {}]
  %s6 = sld [smem:[#allocation0]]
  $region54: #{tpu_custom_call.1} parent=0
    _
  %s8 = ssub.s32 1, %s6
  %s9 = scalar_select 0, %s8, %s6
  $region1: #{tpu_custom_call.1} parent=0
    #allocation3 [shape = 'u8[2048]{0}', space=vmem, size = 0x800, scoped, tag = 'input window, operand 0, single buffered']
    #allocation4 [shape = 's32[1]{0}', space=sflag, size = 0x4, scoped, tag = 'scoped memory for tpu_custom_call.1']
    #allocation5 [shape = 's32[1]{0}', space=sflag, size = 0x4, scoped, tag = 'scoped memory for tpu_custom_call.1']
    #allocation6 [shape = 'u8[32768]{0}', space=vmem, size = 0x8000, scoped, tag = 'input window, operand 1, single buffered']
    #allocation7 [shape = 's32[1]{0}', space=sflag, size = 0x4, scoped, tag = 'scoped memory for tpu_custom_call.1']
    #allocation8 [shape = 'u8[32768]{0}', space=vmem, size = 0x8000, scoped, tag = 'input window, operand 2, single buffered']
    #allocation9 [shape = 'u8[32768]{0}', space=vmem, size = 0x8000, scoped, tag = 'input window, operand 3, single buffered']
    #allocation10 [shape = 's32[1]{0}', space=sflag, size = 0x4, scoped, tag = 'scoped memory for tpu_custom_call.1']
    #allocation11 [shape = 'u8[4096]{0}', space=vmem, size = 0x1000, scoped, tag = 'output window, operand 0, single buffered']
    %10 = vsyncpa [#allocation4], 0
    %11 = vsyncpa [#allocation7], 0
    %12 = vsyncpa [#allocation10], 0
    %13 = vsyncpa [#allocation5], 0
    // Predicated region
    $region2: #{tpu_custom_call.1} parent=1 // pred_check
      _
    $region3: #{tpu_custom_call.1} parent=1 // pred_check_branch
      %15 = sbr.rel (0) target = $region5
    $region4: #{tpu_custom_call.1} parent=1 // pred_region
      %s17 = ssub.s32 64, 64
      %18 = vsyncadd [#allocation4], %s17
      %s20 = sshll.u32 [#allocation3], 4
      %s21 = int_to_ptr.vmem [resolvable:$true] %s20
      %23 = dma.hbm_to_vmem [thread:$0]  %s0, 64, %s21, [#allocation4]
    $region5: #{tpu_custom_call.1} parent=1 // pred_fallthru
      _
    // Predicated region
    $region6: #{tpu_custom_call.1} parent=1 // pred_check
      _
    $region7: #{tpu_custom_call.1} parent=1 // pred_check_branch
      %25 = sbr.rel (0) target = $region9
    $region8: #{tpu_custom_call.1} parent=1 // pred_region
      %s27 = ssub.s32 1024, 1024
      %28 = vsyncadd [#allocation7], %s27
      %s29 = sshll.u32 [#allocation6], 4
      %s30 = int_to_ptr.vmem [resolvable:$true] %s29
      %35 = dma.hbm_to_vmem [thread:$0]  %s1, 1024, %s30, [#allocation7], 64, 64, 4
    $region9: #{tpu_custom_call.1} parent=1 // pred_fallthru
      _
    // Predicated region
    $region10: #{tpu_custom_call.1} parent=1 // pred_check
      _
    $region11: #{tpu_custom_call.1} parent=1 // pred_check_branch
      %37 = sbr.rel (0) target = $region13
    $region12: #{tpu_custom_call.1} parent=1 // pred_region
      %s39 = ssub.s32 1024, 1024
      %40 = vsyncadd [#allocation7], %s39
      %s41 = sshll.u32 [#allocation8], 4
      %s42 = int_to_ptr.vmem [resolvable:$true] %s41
      %47 = dma.hbm_to_vmem [thread:$0]  %s2, 1024, %s42, [#allocation7], 64, 64, 4
    $region13: #{tpu_custom_call.1} parent=1 // pred_fallthru
      _
    // Predicated region
    $region14: #{tpu_custom_call.1} parent=1 // pred_check
      _
    $region15: #{tpu_custom_call.1} parent=1 // pred_check_branch
      %49 = sbr.rel (0) target = $region17
    $region16: #{tpu_custom_call.1} parent=1 // pred_region
      %s51 = ssub.s32 1024, 1024
      %52 = vsyncadd [#allocation10], %s51
      %s53 = sshll.u32 [#allocation9], 4
      %s54 = int_to_ptr.vmem [resolvable:$true] %s53
      %59 = dma.hbm_to_vmem [thread:$0]  %s3, 1024, %s54, [#allocation10], 64, 64, 4
    $region17: #{tpu_custom_call.1} parent=1 // pred_fallthru
      _
    // Predicated region
    $region18: #{tpu_custom_call.1} parent=1 // pred_check
      _
    $region19: #{tpu_custom_call.1} parent=1 // pred_check_branch
      %61 = sbr.rel (0) target = $region21
    $region20: #{tpu_custom_call.1} parent=1 // pred_region
      _
    $region21: #{tpu_custom_call.1} parent=1 // pred_fallthru
      _
    // Predicated region
    $region22: #{tpu_custom_call.1} parent=1 // pred_check
      _
    $region23: #{tpu_custom_call.1} parent=1 // pred_check_branch
      %63 = sbr.rel (0) target = $region25
    $region24: #{tpu_custom_call.1} parent=1 // pred_region
      %64 = dma.done [#allocation4], 64
    $region25: #{tpu_custom_call.1} parent=1 // pred_fallthru
      _
    // Predicated region
    $region26: #{tpu_custom_call.1} parent=1 // pred_check
      _
    $region27: #{tpu_custom_call.1} parent=1 // pred_check_branch
      %66 = sbr.rel (0) target = $region29
    $region28: #{tpu_custom_call.1} parent=1 // pred_region
      %67 = dma.done [#allocation7], 1024
    $region29: #{tpu_custom_call.1} parent=1 // pred_fallthru
      _
    // Predicated region
    $region30: #{tpu_custom_call.1} parent=1 // pred_check
      _
    $region31: #{tpu_custom_call.1} parent=1 // pred_check_branch
      %69 = sbr.rel (0) target = $region33
    $region32: #{tpu_custom_call.1} parent=1 // pred_region
      %70 = dma.done [#allocation7], 1024
    $region33: #{tpu_custom_call.1} parent=1 // pred_fallthru
      _
    // Predicated region
    $region34: #{tpu_custom_call.1} parent=1 // pred_check
      _
    $region35: #{tpu_custom_call.1} parent=1 // pred_check_branch
      %72 = sbr.rel (0) target = $region37
    $region36: #{tpu_custom_call.1} parent=1 // pred_region
      %73 = dma.done [#allocation10], 1024
    $region37: #{tpu_custom_call.1} parent=1 // pred_fallthru
      _
    %p75 = scmp.eq.s32.totalorder 0, 0
    // Predicated region
    $region38: #{tpu_custom_call.1} parent=1 // pred_check
      %p76 = pneg %p75
    $region39: #{tpu_custom_call.1} parent=1 // pred_check_branch
      %78 = sbr.rel (%p76) target = $region41
    $region40: #{tpu_custom_call.1} parent=1 // pred_region
      %vm79 = vcmask 0
      %80 = vst.msk [vmem:[#allocation2] sm:$0x1] %vm79, 0.0
    $region41: #{tpu_custom_call.1} parent=1 // pred_fallthru
      _
    %v81 = vld [vmem:[#allocation3] sm:$0xf]
    %v82 = vld [vmem:[#allocation6] sm:$0xf]
    %v83 = vld [vmem:[#allocation6 + $0x4] sm:$0xf]
    %v84 = vld [vmem:[#allocation6 + $0x8] sm:$0xf]
    %v85 = vld [vmem:[#allocation6 + $0xc] sm:$0xf]
    %v86 = vld [vmem:[#allocation6 + $0x10] sm:$0xf]
    %v87 = vld [vmem:[#allocation6 + $0x14] sm:$0xf]
    %v88 = vld [vmem:[#allocation6 + $0x18] sm:$0xf]
    %v89 = vld [vmem:[#allocation6 + $0x1c] sm:$0xf]
    %v90 = vld [vmem:[#allocation6 + $0x20] sm:$0xf]
    %v91 = vld [vmem:[#allocation6 + $0x24] sm:$0xf]
    %v92 = vld [vmem:[#allocation6 + $0x28] sm:$0xf]
    %v93 = vld [vmem:[#allocation6 + $0x2c] sm:$0xf]
    %v94 = vld [vmem:[#allocation6 + $0x30] sm:$0xf]
    %v95 = vld [vmem:[#allocation6 + $0x34] sm:$0xf]
    %v96 = vld [vmem:[#allocation6 + $0x38] sm:$0xf]
    %v97 = vld [vmem:[#allocation6 + $0x3c] sm:$0xf]
    %v98 = vld [vmem:[%s4] sm:$0x1]
    %v99 = vlaneseq
    %v100 = vshrl.u32 %v99, 7
    %v101 = vsub.s32 0, %v100
    %v102 = vrot.slane %v98, %v101
    %v119 = vunpack.c.l.b16 %v82
    %v120 = vunpack.c.l.b16 %v83
    %v121 = vunpack.c.l.b16 %v84
    %v122 = vunpack.c.l.b16 %v85
    %v123 = vunpack.c.l.b16 %v86
    %v124 = vunpack.c.l.b16 %v87
    %v125 = vunpack.c.l.b16 %v88
    %v126 = vunpack.c.l.b16 %v89
    %v127 = vunpack.c.l.b16 %v90
    %v128 = vunpack.c.l.b16 %v91
    %v129 = vunpack.c.l.b16 %v92
    %v130 = vunpack.c.l.b16 %v93
    %v131 = vunpack.c.l.b16 %v94
    %v132 = vunpack.c.l.b16 %v95
    %v133 = vunpack.c.l.b16 %v96
    %v134 = vunpack.c.l.b16 %v97
    %v135 = vpack.c.b16 %v120, %v119
    %v136 = vpack.c.b16 %v122, %v121
    %v137 = vpack.c.b16 %v124, %v123
    %v138 = vpack.c.b16 %v126, %v125
    %v139 = vpack.c.b16 %v128, %v127
    %v140 = vpack.c.b16 %v130, %v129
    %v141 = vpack.c.b16 %v132, %v131
    %v142 = vpack.c.b16 %v134, %v133
    %151 = vmatprep.subr.bf16.mxu0 0
    %152 = vmatpush1.bf16.msra.mxu0 %v135
    %153 = vmatprep.subr.bf16.mxu0 0
    %154 = vmatpush1.bf16.msra.mxu0 %v136
    %155 = vmatprep.subr.bf16.mxu0 0
    %156 = vmatpush1.bf16.msra.mxu0 %v137
    %157 = vmatprep.subr.bf16.mxu0 0
    %158 = vmatpush1.bf16.msra.mxu0 %v138
    %159 = vmatprep.subr.bf16.mxu0 0
    %160 = vmatpush1.bf16.msra.mxu0 %v139
    %161 = vmatprep.subr.bf16.mxu0 0
    %162 = vmatpush1.bf16.msra.mxu0 %v140
    %163 = vmatprep.subr.bf16.mxu0 0
    %164 = vmatpush1.bf16.msra.mxu0 %v141
    %165 = vmatprep.subr.bf16.mxu0 0
    %166 = vmatpush1.bf16.msra.mxu0 %v142
    %167 = vmatprep.subr.bf16.mxu0 0
    %168 = vmatpush1.bf16.msra.mxu0 0
    %169 = vmatprep.subr.bf16.mxu0 0
    %170 = vmatpush1.bf16.msra.mxu0 0
    %171 = vmatprep.subr.bf16.mxu0 0
    %172 = vmatpush1.bf16.msra.mxu0 0
    %173 = vmatprep.subr.bf16.mxu0 0
    %174 = vmatpush1.bf16.msra.mxu0 0
    %175 = vmatprep.subr.bf16.mxu0 0
    %176 = vmatpush1.bf16.msra.mxu0 0
    %177 = vmatprep.subr.bf16.mxu0 0
    %178 = vmatpush1.bf16.msra.mxu0 0
    %179 = vmatprep.subr.bf16.mxu0 0
    %180 = vmatpush1.bf16.msra.mxu0 0
    %181 = vmatprep.subr.bf16.mxu0 0
    %182 = vmatpush1.bf16.msra.mxu0 0
    %183 = vmatprep.mubr.bf16.mxu0 0
    %184 = vmatmul.mubr.bf16.gmra.mrb[0].mxu0 %v81
    %v185 = vpop.f32.mrb[0].mxu0
    %v186 = vadd.f32 %v102, %v185
    %v187 = vpop.f32.mrb[0].mxu0
    %v188 = vpop.f32.mrb[0].mxu0
    %v189 = vpop.f32.mrb[0].mxu0
    %190 = vdwg.mxu0
    %v191 = vmax.f32 %v186, 0.0
    %v192 = vpack.c.bf16 %v191, %v191
    %v193 = vld [vmem:[#allocation8] sm:$0xf]
    %v194 = vld [vmem:[#allocation8 + $0x4] sm:$0xf]
    %v195 = vld [vmem:[#allocation8 + $0x8] sm:$0xf]
    %v196 = vld [vmem:[#allocation8 + $0xc] sm:$0xf]
    %v197 = vld [vmem:[#allocation8 + $0x10] sm:$0xf]
    %v198 = vld [vmem:[#allocation8 + $0x14] sm:$0xf]
    %v199 = vld [vmem:[#allocation8 + $0x18] sm:$0xf]
    %v200 = vld [vmem:[#allocation8 + $0x1c] sm:$0xf]
    %v201 = vld [vmem:[#allocation8 + $0x20] sm:$0xf]
    %v202 = vld [vmem:[#allocation8 + $0x24] sm:$0xf]
    %v203 = vld [vmem:[#allocation8 + $0x28] sm:$0xf]
    %v204 = vld [vmem:[#allocation8 + $0x2c] sm:$0xf]
    %v205 = vld [vmem:[#allocation8 + $0x30] sm:$0xf]
    %v206 = vld [vmem:[#allocation8 + $0x34] sm:$0xf]
    %v207 = vld [vmem:[#allocation8 + $0x38] sm:$0xf]
    %v208 = vld [vmem:[#allocation8 + $0x3c] sm:$0xf]
    %v209 = vld [vmem:[%s4 + $0x1] sm:$0x1]
    %v210 = vlaneseq
    %v211 = vshrl.u32 %v210, 7
    %v212 = vsub.s32 0, %v211
    %v213 = vrot.slane %v209, %v212
    %v230 = vunpack.c.l.b16 %v193
    %v231 = vunpack.c.l.b16 %v194
    %v232 = vunpack.c.l.b16 %v195
    %v233 = vunpack.c.l.b16 %v196
    %v234 = vunpack.c.l.b16 %v197
    %v235 = vunpack.c.l.b16 %v198
    %v236 = vunpack.c.l.b16 %v199
    %v237 = vunpack.c.l.b16 %v200
    %v238 = vunpack.c.l.b16 %v201
    %v239 = vunpack.c.l.b16 %v202
    %v240 = vunpack.c.l.b16 %v203
    %v241 = vunpack.c.l.b16 %v204
    %v242 = vunpack.c.l.b16 %v205
    %v243 = vunpack.c.l.b16 %v206
    %v244 = vunpack.c.l.b16 %v207
    %v245 = vunpack.c.l.b16 %v208
    %v246 = vpack.c.b16 %v231, %v230
    %v247 = vpack.c.b16 %v233, %v232
    %v248 = vpack.c.b16 %v235, %v234
    %v249 = vpack.c.b16 %v237, %v236
    %v250 = vpack.c.b16 %v239, %v238
    %v251 = vpack.c.b16 %v241, %v240
    %v252 = vpack.c.b16 %v243, %v242
    %v253 = vpack.c.b16 %v245, %v244
    %262 = vmatprep.subr.bf16.mxu0 0
    %263 = vmatpush1.bf16.msra.mxu0 %v246
    %264 = vmatprep.subr.bf16.mxu0 0
    %265 = vmatpush1.bf16.msra.mxu0 %v247
    %266 = vmatprep.subr.bf16.mxu0 0
    %267 = vmatpush1.bf16.msra.mxu0 %v248
    %268 = vmatprep.subr.bf16.mxu0 0
    %269 = vmatpush1.bf16.msra.mxu0 %v249
    %270 = vmatprep.subr.bf16.mxu0 0
    %271 = vmatpush1.bf16.msra.mxu0 %v250
    %272 = vmatprep.subr.bf16.mxu0 0
    %273 = vmatpush1.bf16.msra.mxu0 %v251
    %274 = vmatprep.subr.bf16.mxu0 0
    %275 = vmatpush1.bf16.msra.mxu0 %v252
    %276 = vmatprep.subr.bf16.mxu0 0
    %277 = vmatpush1.bf16.msra.mxu0 %v253
    %278 = vmatprep.subr.bf16.mxu0 0
    %279 = vmatpush1.bf16.msra.mxu0 0
    %280 = vmatprep.subr.bf16.mxu0 0
    %281 = vmatpush1.bf16.msra.mxu0 0
    %282 = vmatprep.subr.bf16.mxu0 0
    %283 = vmatpush1.bf16.msra.mxu0 0
    %284 = vmatprep.subr.bf16.mxu0 0
    %285 = vmatpush1.bf16.msra.mxu0 0
    %286 = vmatprep.subr.bf16.mxu0 0
    %287 = vmatpush1.bf16.msra.mxu0 0
    %288 = vmatprep.subr.bf16.mxu0 0
    %289 = vmatpush1.bf16.msra.mxu0 0
    %290 = vmatprep.subr.bf16.mxu0 0
    %291 = vmatpush1.bf16.msra.mxu0 0
    %292 = vmatprep.subr.bf16.mxu0 0
    %293 = vmatpush1.bf16.msra.mxu0 0
    %294 = vmatprep.mubr.bf16.mxu0 0
    %295 = vmatmul.mubr.bf16.gmra.mrb[0].mxu0 %v192
    %v296 = vpop.f32.mrb[0].mxu0
    %v297 = vadd.f32 %v213, %v296
    %v298 = vpop.f32.mrb[0].mxu0
    %v299 = vpop.f32.mrb[0].mxu0
    %v300 = vpop.f32.mrb[0].mxu0
    %301 = vdwg.mxu0
    %v302 = vmax.f32 %v297, 0.0
    %v303 = vpack.c.bf16 %v302, %v302
    %v304 = vld [vmem:[#allocation9] sm:$0xf]
    %v305 = vld [vmem:[#allocation9 + $0x4] sm:$0xf]
    %v306 = vld [vmem:[#allocation9 + $0x8] sm:$0xf]
    %v307 = vld [vmem:[#allocation9 + $0xc] sm:$0xf]
    %v308 = vld [vmem:[#allocation9 + $0x10] sm:$0xf]
    %v309 = vld [vmem:[#allocation9 + $0x14] sm:$0xf]
    %v310 = vld [vmem:[#allocation9 + $0x18] sm:$0xf]
    %v311 = vld [vmem:[#allocation9 + $0x1c] sm:$0xf]
    %v312 = vld [vmem:[#allocation9 + $0x20] sm:$0xf]
    %v313 = vld [vmem:[#allocation9 + $0x24] sm:$0xf]
    %v314 = vld [vmem:[#allocation9 + $0x28] sm:$0xf]
    %v315 = vld [vmem:[#allocation9 + $0x2c] sm:$0xf]
    %v316 = vld [vmem:[#allocation9 + $0x30] sm:$0xf]
    %v317 = vld [vmem:[#allocation9 + $0x34] sm:$0xf]
    %v318 = vld [vmem:[#allocation9 + $0x38] sm:$0xf]
    %v319 = vld [vmem:[#allocation9 + $0x3c] sm:$0xf]
    %v320 = vld [vmem:[%s4 + $0x2] sm:$0x1]
    %v321 = vlaneseq
    %v322 = vshrl.u32 %v321, 7
    %v323 = vsub.s32 0, %v322
    %v324 = vrot.slane %v320, %v323
    %v341 = vunpack.c.l.b16 %v304
    %v342 = vunpack.c.l.b16 %v305
    %v343 = vunpack.c.l.b16 %v306
    %v344 = vunpack.c.l.b16 %v307
    %v345 = vunpack.c.l.b16 %v308
    %v346 = vunpack.c.l.b16 %v309
    %v347 = vunpack.c.l.b16 %v310
    %v348 = vunpack.c.l.b16 %v311
    %v349 = vunpack.c.l.b16 %v312
    %v350 = vunpack.c.l.b16 %v313
    %v351 = vunpack.c.l.b16 %v314
    %v352 = vunpack.c.l.b16 %v315
    %v353 = vunpack.c.l.b16 %v316
    %v354 = vunpack.c.l.b16 %v317
    %v355 = vunpack.c.l.b16 %v318
    %v356 = vunpack.c.l.b16 %v319
    %v357 = vpack.c.b16 %v342, %v341
    %v358 = vpack.c.b16 %v344, %v343
    %v359 = vpack.c.b16 %v346, %v345
    %v360 = vpack.c.b16 %v348, %v347
    %v361 = vpack.c.b16 %v350, %v349
    %v362 = vpack.c.b16 %v352, %v351
    %v363 = vpack.c.b16 %v354, %v353
    %v364 = vpack.c.b16 %v356, %v355
    %373 = vmatprep.subr.bf16.mxu0 0
    %374 = vmatpush1.bf16.msra.mxu0 %v357
    %375 = vmatprep.subr.bf16.mxu0 0
    %376 = vmatpush1.bf16.msra.mxu0 %v358
    %377 = vmatprep.subr.bf16.mxu0 0
    %378 = vmatpush1.bf16.msra.mxu0 %v359
    %379 = vmatprep.subr.bf16.mxu0 0
    %380 = vmatpush1.bf16.msra.mxu0 %v360
    %381 = vmatprep.subr.bf16.mxu0 0
    %382 = vmatpush1.bf16.msra.mxu0 %v361
    %383 = vmatprep.subr.bf16.mxu0 0
    %384 = vmatpush1.bf16.msra.mxu0 %v362
    %385 = vmatprep.subr.bf16.mxu0 0
    %386 = vmatpush1.bf16.msra.mxu0 %v363
    %387 = vmatprep.subr.bf16.mxu0 0
    %388 = vmatpush1.bf16.msra.mxu0 %v364
    %389 = vmatprep.subr.bf16.mxu0 0
    %390 = vmatpush1.bf16.msra.mxu0 0
    %391 = vmatprep.subr.bf16.mxu0 0
    %392 = vmatpush1.bf16.msra.mxu0 0
    %393 = vmatprep.subr.bf16.mxu0 0
    %394 = vmatpush1.bf16.msra.mxu0 0
    %395 = vmatprep.subr.bf16.mxu0 0
    %396 = vmatpush1.bf16.msra.mxu0 0
    %397 = vmatprep.subr.bf16.mxu0 0
    %398 = vmatpush1.bf16.msra.mxu0 0
    %399 = vmatprep.subr.bf16.mxu0 0
    %400 = vmatpush1.bf16.msra.mxu0 0
    %401 = vmatprep.subr.bf16.mxu0 0
    %402 = vmatpush1.bf16.msra.mxu0 0
    %403 = vmatprep.subr.bf16.mxu0 0
    %404 = vmatpush1.bf16.msra.mxu0 0
    %405 = vmatprep.mubr.bf16.mxu0 0
    %406 = vmatmul.mubr.bf16.gmra.mrb[0].mxu0 %v303
    %v407 = vpop.f32.mrb[0].mxu0
    %v408 = vadd.f32 %v324, %v407
    %v409 = vpop.f32.mrb[0].mxu0
    %v410 = vpop.f32.mrb[0].mxu0
    %v411 = vpop.f32.mrb[0].mxu0
    %412 = vdwg.mxu0
    %s413 = smul.u32 0, 8
    %415 = vset.pattern.permute.xlu0 4
    %416 = vperm.xlu0 %415, %v408
    %v417 = vpop.permute.xlu0 %416
    %v419 = vadd.f32 %v408, %v417
    %s420 = scalar_lea.vmem [#allocation11], %s413
    %421 = vst [vmem:[%s420] sm:$0xff] %v419
    %v422 = vlaneseq
    %v423 = vshrl.u32 %v422, 7
    %v424 = vstv %s413
    %v425 = vadd.s32 %v423, %v424
    %v426 = vlaneseq
    %v427 = vand.u32 %v426, 127
    %vm428 = vcmp.lt.s32.totalorder %v425, 8
    %vm429 = vcmp.lt.s32.totalorder %v427, 4
    %vm430 = vmand %vm428, %vm429
    %v431 = vld [vmem:[#allocation2] sm:$0x1]
    %v432 = vsel %vm430, %v408, 0.0
    %433 = vadd.xlane.f32.xlu0 %v432
    %v434 = vpop.xlane.xlu0 %433
    %v435 = vrot.slane %v434, 4
    %v436 = vadd.f32 %v434, %v435
    %v437 = vrot.slane %v436, 2
    %v438 = vadd.f32 %v436, %v437
    %v439 = vrot.slane %v438, 1
    %v440 = vadd.f32 %v438, %v439
    %s441 = vtos %v440
    %v442 = vstv %s441
    %v443 = vadd.f32 %v431, %v442
    %vm444 = vcmask 0
    %445 = vst.msk [vmem:[#allocation2] sm:$0x1] %vm444, %v443
    // Predicated region
    $region42: #{tpu_custom_call.1} parent=1 // pred_check
      %p446 = pneg %p75
    $region43: #{tpu_custom_call.1} parent=1 // pred_check_branch
      %448 = sbr.rel (%p446) target = $region45
    $region44: #{tpu_custom_call.1} parent=1 // pred_region
      %v449 = vld [vmem:[#allocation2] sm:$0x1]
      %v450 = vmul.f32 %v449, 0.03125
      %v451 = vld [vmem:[#allocation11] sm:$0xff]
      %v453 = vlaneseq
      %v454 = vshrl.u32 %v453, 7
      %v455 = vsub.s32 0, %v454
      %v456 = vrot.slane %v450, %v455
      %457 = vset.pattern.permute.xlu0 0
      %458 = vperm.xlu0 %457, %v456
      %v459 = vpop.permute.xlu0 %458
      %v461 = vsub.f32 %v451, %v459
      %462 = vst [vmem:[#allocation11] sm:$0xff] %v461
    $region45: #{tpu_custom_call.1} parent=1 // pred_fallthru
      _
    // Predicated region
    $region46: #{tpu_custom_call.1} parent=1 // pred_check
      _
    $region47: #{tpu_custom_call.1} parent=1 // pred_check_branch
      %464 = sbr.rel (0) target = $region49
    $region48: #{tpu_custom_call.1} parent=1 // pred_region
      %s466 = ssub.s32 128, 128
      %467 = vsyncadd [#allocation5], %s466
      %s469 = sshll.u32 [#allocation11], 4
      %s470 = int_to_ptr.vmem [resolvable:$true] %s469
      %472 = dma.vmem_to_hbm [thread:$0]  %s470, 128, %s5, [#allocation5]
    $region49: #{tpu_custom_call.1} parent=1 // pred_fallthru
      _
    // Predicated region
    $region50: #{tpu_custom_call.1} parent=1 // pred_check
      _
    $region51: #{tpu_custom_call.1} parent=1 // pred_check_branch
      %474 = sbr.rel (0) target = $region53
    $region52: #{tpu_custom_call.1} parent=1 // pred_region
      %475 = dma.done [#allocation5], 128
    $region53: #{tpu_custom_call.1} parent=1 // pred_fallthru
      _
    %476 = vsyncpa [#allocation4], 1
    %477 = vsyncpa [#allocation7], 1
    %478 = vsyncpa [#allocation10], 1
    %479 = vsyncpa [#allocation5], 1

</llo_original>
